<compile_context>
chip_gen: v7x
topology: tpu7x:2x2x1
jax: 0.10.0
libtpu: 0.0.40
codegen_flags: <defaults>
</compile_context>

<pallas_src>
import jax
import jax.numpy as jnp
from jax import lax
from jax.experimental import pallas as pl
from jax.experimental.pallas import tpu as pltpu


def _gelu(h, approximate):
    if approximate:
        # tanh formulation routes through the EUP slot (cheap under MXU work).
        return jax.nn.gelu(h, approximate=True)
    # Exact erf GELU, matching torch.nn.GELU's default.
    return 0.5 * h * (1.0 + lax.erf(h * 0.7071067811865476))


def _make_ffn_kernel(h_chunk, n_chunks, approximate):
    """Kernel over one (TM, C) row tile; weights fully resident in VMEM."""

    def kernel(x_ref, w1_ref, b1_ref, w2_ref, b2_ref, o_ref):
        x = x_ref[...]                       # native dtype straight into the MXU

        def one_chunk(w1c, b1c, w2c):
            h = jnp.dot(x, w1c, preferred_element_type=jnp.float32)
            h = _gelu(h + b1c.astype(jnp.float32), approximate)
            h = h.astype(w2c.dtype)          # back to the MXU operand dtype
            return jnp.dot(h, w2c, preferred_element_type=jnp.float32)

        if n_chunks == 1:
            acc = one_chunk(w1_ref[...], b1_ref[...], w2_ref[...])
        else:
            def body(k, acc):
                off = pl.multiple_of(k * h_chunk, h_chunk)
                return acc + one_chunk(
                    w1_ref[:, pl.ds(off, h_chunk)],
                    b1_ref[:, pl.ds(off, h_chunk)],
                    w2_ref[pl.ds(off, h_chunk), :],
                )

            acc = lax.fori_loop(0, n_chunks, body,
                                jnp.zeros(o_ref.shape, jnp.float32),
                                unroll=True)

        o_ref[...] = (acc + b2_ref[...].astype(jnp.float32)).astype(o_ref.dtype)

    return kernel


def _round_up(x, mult):
    return ((x + mult - 1) // mult) * mult


def _pick_h_chunk(hdim, target):
    """Largest multiple of 128 <= target that divides hdim, else hdim."""
    if hdim <= target or hdim % 128 != 0:
        return hdim
    c = (target // 128) * 128
    while c >= 128:
        if hdim % c == 0:
            return c
        c -= 128
    return hdim


def _physical_vmem_bytes():
    try:
        return int(pltpu.get_tpu_info().vmem_capacity_bytes)
    except Exception:  # conservative fallback: v7x size
        return 64 * 1024 * 1024


def ffn_pallas(x, w1, b1, w2, b2, *, tm=512, h_chunk=None, compute_dtype=None,
               approximate_gelu=False, vmem_limit_bytes=None):
    """x: (..., C).  w1: (C, H), b1: (H,), w2: (H, C), b2: (C,).

    tm:            token-row tile; clamped / split so the grid has >= 2 steps
                   when there is enough work (both v7x TensorCores busy) and
                   rounded to the dtype's sublane packing.
    h_chunk:       hidden-dim chunk per inner-loop step (default: largest
                   multiple of 128 <= 512 that divides H).
    compute_dtype: optional MXU operand dtype (e.g. jnp.bfloat16); output and
                   accumulation stay in f32 / the input dtype.
    """
    orig_shape = x.shape
    out_dtype = x.dtype
    c = orig_shape[-1]
    hdim = w1.shape[1]

    if compute_dtype is not None:
        x = x.astype(compute_dtype)
        w1 = w1.astype(compute_dtype)
        w2 = w2.astype(compute_dtype)

    x2d = x.reshape(-1, c)
    m = x2d.shape[0]
    x_bytes = jnp.dtype(x2d.dtype).itemsize
    w_bytes = jnp.dtype(w1.dtype).itemsize
    o_bytes = jnp.dtype(out_dtype).itemsize

    # Row alignment matching sublane packing: 8 (f32) / 16 (bf16) / 32 (int8).
    row_align = max(8, 32 // x_bytes)

    # Clamp the row tile; ensure the grid splits when there is enough work.
    tm = max(row_align, min(tm, _round_up(m, row_align)))
    if m > 2 * row_align and pl.cdiv(m, tm) < 2:
        tm = _round_up(pl.cdiv(m, 2), row_align)
    grid = (pl.cdiv(m, tm),)

    h_chunk = _pick_h_chunk(hdim, 512 if h_chunk is None else h_chunk)
    n_chunks = hdim // h_chunk

    if vmem_limit_bytes is None:
        est = (
            2 * tm * c * x_bytes              # x tile, double-buffered
            + 2 * tm * c * o_bytes            # out tile, double-buffered
            + c * hdim * w_bytes              # W1, resident (1 buffer)
            + hdim * c * w_bytes              # W2, resident (1 buffer)
            + 2 * (hdim + c) * w_bytes        # biases
            + tm * c * 4                      # f32 accumulator
            + 2 * tm * h_chunk * 4            # f32 hidden chunk (x2 for overlap)
        )
        phys = _physical_vmem_bytes()
        cap = max(phys - (8 << 20), 8 << 20)  # leave ~8 MiB headroom below HW
        vmem_limit_bytes = min(max(int(est * 1.25) + (2 << 20), 32 << 20), cap)

    resident = pl.Buffered(1)  # weight/bias block index never changes

    cost = pl.CostEstimate(
        flops=4 * m * c * hdim,
        transcendentals=m * hdim,
        bytes_accessed=(m * c * (x_bytes + o_bytes)
                        + 2 * c * hdim * w_bytes + (hdim + c) * w_bytes),
    )

    kernel = _make_ffn_kernel(h_chunk, n_chunks, approximate_gelu)

    out = pl.pallas_call(
        kernel,
        out_shape=jax.ShapeDtypeStruct((m, c), out_dtype),
        grid_spec=pltpu.PrefetchScalarGridSpec(
            num_scalar_prefetch=0,
            grid=grid,
            in_specs=[
                pl.BlockSpec((tm, c), lambda i: (i, 0)),                            # x tile
                pl.BlockSpec((c, hdim), lambda i: (0, 0), pipeline_mode=resident),  # W1
                pl.BlockSpec((1, hdim), lambda i: (0, 0), pipeline_mode=resident),  # b1
                pl.BlockSpec((hdim, c), lambda i: (0, 0), pipeline_mode=resident),  # W2
                pl.BlockSpec((1, c), lambda i: (0, 0), pipeline_mode=resident),     # b2
            ],
            out_specs=pl.BlockSpec((tm, c), lambda i: (i, 0)),
        ),
        compiler_params=pltpu.CompilerParams(
            dimension_semantics=("parallel",),
            vmem_limit_bytes=int(vmem_limit_bytes),
        ),
        cost_estimate=cost,
    )(x2d, w1, b1.reshape(1, hdim), w2, b2.reshape(1, c))

    return out.reshape(orig_shape)


def init_ffn_params(key, in_features, hidden_features, dtype=jnp.float32):
    """Matches FFN._init_weights: trunc_normal_(std=0.02) weights, zero biases.
    Weights stored transposed relative to nn.Linear, i.e. (in, out)."""
    k1, k2 = jax.random.split(key)
    w1 = (jax.random.truncated_normal(
        k1, -2.0, 2.0, (in_features, hidden_features)) * 0.02).astype(dtype)
    b1 = jnp.zeros((hidden_features,), dtype)
    w2 = (jax.random.truncated_normal(
        k2, -2.0, 2.0, (hidden_features, in_features)) * 0.02).astype(dtype)
    b2 = jnp.zeros((in_features,), dtype)
    return w1, b1, w2, b2


if __name__ == "__main__":
    key = jax.random.PRNGKey(0)
    kx, kp = jax.random.split(key)

    # Small demo shapes.  N=13 is intentionally ragged (exercises the masked
    # trailing row tile and the >=2-step grid split); C=128 / H=512 keep the
    # blocks lane-dense and, with h_chunk=256, exercise the in-kernel
    # hidden-dim chunk loop.
    B, N, C, H = 2, 13, 128, 512
    x = jax.random.normal(kx, (B, N, C), dtype=jnp.float32)
    w1, b1, w2, b2 = init_ffn_params(kp, C, H)

    # f32 path: matches torch's f32 nn.Linear + exact-erf nn.GELU semantics.
    y = ffn_pallas(x, w1, b1, w2, b2, h_chunk=256)
    y = jax.block_until_ready(y)

    h_ref = jax.nn.gelu(x @ w1 + b1, approximate=False)
    y_ref = h_ref @ w2 + b2
    assert y.shape == x.shape
    assert jnp.allclose(y, y_ref, atol=1e-4, rtol=1e-4)

    # bf16-fed MXU path (f32 accumulation) — the v6e/v7x performance path.
    y_bf = ffn_pallas(x, w1, b1, w2, b2, h_chunk=256,
                      compute_dtype=jnp.bfloat16)
    y_bf = jax.block_until_ready(y_bf)
    xb = x.astype(jnp.bfloat16).astype(jnp.float32)
    w1b = w1.astype(jnp.bfloat16).astype(jnp.float32)
    w2b = w2.astype(jnp.bfloat16).astype(jnp.float32)
    y_bf_ref = jax.nn.gelu(xb @ w1b + b1, approximate=False) @ w2b + b2
    assert y_bf.shape == x.shape
    assert jnp.allclose(y_bf, y_bf_ref, atol=1e-2, rtol=1e-2)

    print("KERNEL_OK")
</pallas_src>

<mosaic_0001>
module attributes {stable_mosaic.version = 11 : i64} {
  func.func @kernel(%arg0: i32, %arg1: memref<16x128xf32, #tpu.memory_space<vmem>>, %arg2: memref<128x512xf32, #tpu.memory_space<vmem>>, %arg3: memref<1x512xf32, #tpu.memory_space<vmem>>, %arg4: memref<512x128xf32, #tpu.memory_space<vmem>>, %arg5: memref<1x128xf32, #tpu.memory_space<vmem>>, %arg6: memref<16x128xf32, #tpu.memory_space<vmem>>) attributes {dimension_semantics = [#tpu.dimension_semantics<parallel>], iteration_bounds = array<i64: 2>, scalar_prefetch = 0 : i64, scratch_operands = 0 : i64, tpu.core_type = #tpu.core_type<tc>, window_params = [{transform_indices = @transform_0, window_bounds = array<i64: 16, 128>}, {pipeline_mode = #tpu.pipeline_mode<synchronous>, transform_indices = @transform_1, window_bounds = array<i64: 128, 512>}, {pipeline_mode = #tpu.pipeline_mode<synchronous>, transform_indices = @transform_2, window_bounds = array<i64: 1, 512>}, {pipeline_mode = #tpu.pipeline_mode<synchronous>, transform_indices = @transform_3, window_bounds = array<i64: 512, 128>}, {pipeline_mode = #tpu.pipeline_mode<synchronous>, transform_indices = @transform_4, window_bounds = array<i64: 1, 128>}, {transform_indices = @transform_5, window_bounds = array<i64: 16, 128>}]} {
    %c0 = arith.constant 0 : index
    %c0_0 = arith.constant 0 : index
    %0 = vector.load %arg1[%c0, %c0_0] : memref<16x128xf32, #tpu.memory_space<vmem>>, vector<16x128xf32>
    %cst = arith.constant 0.000000e+00 : f32
    %1 = vector.broadcast %cst : f32 to vector<16x128xf32>
    %c0_i32 = arith.constant 0 : i32
    %c256_i32 = arith.constant 256 : i32
    %2 = arith.muli %c0_i32, %c256_i32 : i32
    %3 = tpu.assume_multiple %2, 256 : i32
    %c0_1 = arith.constant 0 : index
    %4 = arith.index_cast %3 : i32 to index
    %5 = vector.load %arg2[%c0_1, %4] : memref<128x512xf32, #tpu.memory_space<vmem>>, vector<128x256xf32>
    %c0_2 = arith.constant 0 : index
    %6 = arith.index_cast %3 : i32 to index
    %7 = vector.load %arg3[%c0_2, %6] : memref<1x512xf32, #tpu.memory_space<vmem>>, vector<1x256xf32>
    %8 = arith.index_cast %3 : i32 to index
    %c0_3 = arith.constant 0 : index
    %9 = vector.load %arg4[%8, %c0_3] : memref<512x128xf32, #tpu.memory_space<vmem>>, vector<256x128xf32>
    %cst_4 = arith.constant dense<0.000000e+00> : vector<16x256xf32>
    %10 = tpu.matmul %0, %5, %cst_4 {dimension_numbers = #tpu.dot_dimension_numbers<[1], [0], [0], [1], [0, 0, 1, 1], [], []>} : vector<16x128xf32>, vector<128x256xf32>, vector<16x256xf32> -> vector<16x256xf32>
    %11 = vector.broadcast %7 : vector<1x256xf32> to vector<16x256xf32>
    %12 = arith.addf %10, %11 : vector<16x256xf32>
    %cst_5 = arith.constant 5.000000e-01 : f32
    %13 = vector.broadcast %cst_5 : f32 to vector<16x256xf32>
    %14 = arith.mulf %13, %12 : vector<16x256xf32>
    %cst_6 = arith.constant 0.707106769 : f32
    %15 = vector.broadcast %cst_6 : f32 to vector<16x256xf32>
    %16 = arith.mulf %12, %15 : vector<16x256xf32>
    %17 = math.erf %16 : vector<16x256xf32>
    %cst_7 = arith.constant 1.000000e+00 : f32
    %18 = vector.broadcast %cst_7 : f32 to vector<16x256xf32>
    %19 = arith.addf %18, %17 : vector<16x256xf32>
    %20 = arith.mulf %14, %19 : vector<16x256xf32>
    %cst_8 = arith.constant dense<0.000000e+00> : vector<16x128xf32>
    %21 = tpu.matmul %20, %9, %cst_8 {dimension_numbers = #tpu.dot_dimension_numbers<[1], [0], [0], [1], [0, 0, 1, 1], [], []>} : vector<16x256xf32>, vector<256x128xf32>, vector<16x128xf32> -> vector<16x128xf32>
    %22 = arith.addf %1, %21 : vector<16x128xf32>
    %c1_i32 = arith.constant 1 : i32
    %c256_i32_9 = arith.constant 256 : i32
    %23 = arith.muli %c1_i32, %c256_i32_9 : i32
    %24 = tpu.assume_multiple %23, 256 : i32
    %c0_10 = arith.constant 0 : index
    %25 = arith.index_cast %24 : i32 to index
    %26 = vector.load %arg2[%c0_10, %25] : memref<128x512xf32, #tpu.memory_space<vmem>>, vector<128x256xf32>
    %c0_11 = arith.constant 0 : index
    %27 = arith.index_cast %24 : i32 to index
    %28 = vector.load %arg3[%c0_11, %27] : memref<1x512xf32, #tpu.memory_space<vmem>>, vector<1x256xf32>
    %29 = arith.index_cast %24 : i32 to index
    %c0_12 = arith.constant 0 : index
    %30 = vector.load %arg4[%29, %c0_12] : memref<512x128xf32, #tpu.memory_space<vmem>>, vector<256x128xf32>
    %cst_13 = arith.constant dense<0.000000e+00> : vector<16x256xf32>
    %31 = tpu.matmul %0, %26, %cst_13 {dimension_numbers = #tpu.dot_dimension_numbers<[1], [0], [0], [1], [0, 0, 1, 1], [], []>} : vector<16x128xf32>, vector<128x256xf32>, vector<16x256xf32> -> vector<16x256xf32>
    %32 = vector.broadcast %28 : vector<1x256xf32> to vector<16x256xf32>
    %33 = arith.addf %31, %32 : vector<16x256xf32>
    %cst_14 = arith.constant 5.000000e-01 : f32
    %34 = vector.broadcast %cst_14 : f32 to vector<16x256xf32>
    %35 = arith.mulf %34, %33 : vector<16x256xf32>
    %cst_15 = arith.constant 0.707106769 : f32
    %36 = vector.broadcast %cst_15 : f32 to vector<16x256xf32>
    %37 = arith.mulf %33, %36 : vector<16x256xf32>
    %38 = math.erf %37 : vector<16x256xf32>
    %cst_16 = arith.constant 1.000000e+00 : f32
    %39 = vector.broadcast %cst_16 : f32 to vector<16x256xf32>
    %40 = arith.addf %39, %38 : vector<16x256xf32>
    %41 = arith.mulf %35, %40 : vector<16x256xf32>
    %cst_17 = arith.constant dense<0.000000e+00> : vector<16x128xf32>
    %42 = tpu.matmul %41, %30, %cst_17 {dimension_numbers = #tpu.dot_dimension_numbers<[1], [0], [0], [1], [0, 0, 1, 1], [], []>} : vector<16x256xf32>, vector<256x128xf32>, vector<16x128xf32> -> vector<16x128xf32>
    %43 = arith.addf %22, %42 : vector<16x128xf32>
    %c2_i32 = arith.constant 2 : i32
    %c0_18 = arith.constant 0 : index
    %c0_19 = arith.constant 0 : index
    %44 = vector.load %arg5[%c0_18, %c0_19] : memref<1x128xf32, #tpu.memory_space<vmem>>, vector<1x128xf32>
    %45 = vector.broadcast %44 : vector<1x128xf32> to vector<16x128xf32>
    %46 = arith.addf %43, %45 : vector<16x128xf32>
    %c0_20 = arith.constant 0 : index
    %c0_21 = arith.constant 0 : index
    %47 = vector.load %arg6[%c0_20, %c0_21] : memref<16x128xf32, #tpu.memory_space<vmem>>, vector<16x128xf32>
    tpu.vector_store %arg6[%c0_20, %c0_21], %46 {strides = array<i32>} : memref<16x128xf32, #tpu.memory_space<vmem>>, vector<16x128xf32>,
    return
  }
  func.func @transform_0(%arg0: i32) -> (i32, i32) {
    %c0_i32 = arith.constant 0 : i32
    %c0_i32_0 = arith.constant 0 : i32
    return %arg0, %c0_i32 : i32, i32
  }
  func.func @transform_1(%arg0: i32) -> (i32, i32) {
    %c0_i32 = arith.constant 0 : i32
    %c0_i32_0 = arith.constant 0 : i32
    %c0_i32_1 = arith.constant 0 : i32
    return %c0_i32, %c0_i32_0 : i32, i32
  }
  func.func @transform_2(%arg0: i32) -> (i32, i32) {
    %c0_i32 = arith.constant 0 : i32
    %c0_i32_0 = arith.constant 0 : i32
    %c0_i32_1 = arith.constant 0 : i32
    return %c0_i32, %c0_i32_0 : i32, i32
  }
  func.func @transform_3(%arg0: i32) -> (i32, i32) {
    %c0_i32 = arith.constant 0 : i32
    %c0_i32_0 = arith.constant 0 : i32
    %c0_i32_1 = arith.constant 0 : i32
    return %c0_i32, %c0_i32_0 : i32, i32
  }
  func.func @transform_4(%arg0: i32) -> (i32, i32) {
    %c0_i32 = arith.constant 0 : i32
    %c0_i32_0 = arith.constant 0 : i32
    %c0_i32_1 = arith.constant 0 : i32
    return %c0_i32, %c0_i32_0 : i32, i32
  }
  func.func @transform_5(%arg0: i32) -> (i32, i32) {
    %c0_i32 = arith.constant 0 : i32
    %c0_i32_0 = arith.constant 0 : i32
    return %arg0, %c0_i32 : i32, i32
  }
}

</mosaic_0001>

<llo_original>
// kernel: tpu_custom_call.1
$region0: #{tpu_custom_call.1}
  #allocation0 [shape = 'u32[]', space=smem, size = 0x4, offset = 0x4, fixed_abs, tag = 'smem constant byte address 0x4 - core index']
  #allocation1 [shape = 'u32[144,128]{1,0:T(1,128)}', space=vmem, size = 0x12000, scoped, tag = 'internal scratch']
  %s0 = inlined_call_operand.hbm [shape: f32[26,128], index: 0, kind: input, shape index: {}]
  %s1 = inlined_call_operand.hbm [shape: f32[128,512], index: 1, kind: input, shape index: {}]
  %s2 = inlined_call_operand.vmem [shape: f32[1,512], index: 2, kind: input, shape index: {}]
  %s3 = inlined_call_operand.hbm [shape: f32[512,128], index: 3, kind: input, shape index: {}]
  %s4 = inlined_call_operand.vmem [shape: f32[1,128], index: 4, kind: input, shape index: {}]
  %s5 = inlined_call_operand.hbm [shape: f32[26,128], index: 5, kind: output, shape index: {}]
  %s6 = sld [smem:[#allocation0]]
  $region65: #{tpu_custom_call.1} parent=0
    _
  %s8 = ssub.s32 1, %s6
  %s9 = scalar_select 0, %s8, %s6
  $region1: #{tpu_custom_call.1} parent=0
    #allocation2 [shape = 'u8[16384]{0}', space=vmem, size = 0x4000, scoped, tag = 'input window, operand 0']
    #allocation3 [shape = 's32[2]{0}', space=sflag, size = 0x8, scoped, tag = 'scoped memory for tpu_custom_call.1']
    #allocation4 [shape = 's32[2]{0}', space=sflag, size = 0x8, scoped, tag = 'scoped memory for tpu_custom_call.1']
    #allocation5 [shape = 'u8[262144]{0}', space=vmem, size = 0x40000, scoped, tag = 'input window, operand 1, single buffered']
    #allocation6 [shape = 's32[1]{0}', space=sflag, size = 0x4, scoped, tag = 'scoped memory for tpu_custom_call.1']
    #allocation7 [shape = 'u8[262144]{0}', space=vmem, size = 0x40000, scoped, tag = 'input window, operand 3, single buffered']
    #allocation8 [shape = 'u8[16384]{0}', space=vmem, size = 0x4000, scoped, tag = 'output window, operand 0']
    %10 = vsyncpa [#allocation3], 0
    %s11 = scalar_lea.sflag [#allocation3], 1
    %12 = vsyncpa %s11, 0
    %13 = vsyncpa [#allocation6], 0
    %14 = vsyncpa [#allocation4], 0
    %s15 = scalar_lea.sflag [#allocation4], 1
    %16 = vsyncpa %s15, 0
    loop: start=0, step=1, limit=4
    $region2: #{tpu_custom_call.1} parent=1 // loop_pre_header
      _
    $region3: #{tpu_custom_call.1} parent=1 // loop_header
      %s18 = sphi 0, %s22
      %p19 = scmp.ge.s32.totalorder %s18, 4
      %s28 = sphi 0, %s30
      %s31 = sphi 0, %s28
      %s32 = sphi 0, %s31
      %s48 = sphi 0, %s32
      %s52 = sphi 0, %s52
      %s54 = sphi 0, %s52
      %s55 = sphi 0, %s54
      %s69 = sphi 0, %s55
      %s73 = sphi 0, %s73
      %s75 = sphi 0, %s73
      %s76 = sphi 0, %s75
      %s90 = sphi 0, %s76
      %s94 = sphi 0, %s94
      %s96 = sphi 0, %s94
      %s97 = sphi 0, %s96
      %s111 = sphi 0, %s97
      %s115 = sphi 0, %s115
      %s117 = sphi 0, %s115
      %s118 = sphi 0, %s117
      %s132 = sphi 0, %s118
      %s138 = sphi 0, %s140
      %s141 = sphi 0, %s138
      %s142 = sphi 0, %s141
      %s158 = sphi 0, %s142
    $region4: #{tpu_custom_call.1} parent=1 // loop_header_branch
      %21 = sbr.rel (%p19) target = $region8
    $region5: #{tpu_custom_call.1} parent=1 // loop_body
      %s23 = ssub.s32 %s18, 1
      %s24 = ssub.s32 %s18, 2
      %s25 = sadd.s32 %s18, 1
      %s26 = ssub.s32 %s18, %s25
      %p27 = scmp.eq.s32.totalorder %s26, 0
      %s29 = sadd.s32 %s28, 1
      %s30 = scalar_select %p27, %s28, %s29
      %p33 = pneg %p27
      %p34 = scmp.eq.s32.totalorder %s18, 1
      %p35 = por %p33, %p34
      %p36 = scmp.ne.s32.totalorder %s28, %s31
      %p37 = scmp.eq.s32.totalorder %s18, 0
      %p38 = por %p36, %p37
      %p39 = scmp.ne.s32.totalorder %s28, %s31
      %p40 = scmp.eq.s32.totalorder %s23, 1
      %p41 = por %p39, %p40
      %p42 = scmp.ne.s32.totalorder %s31, %s32
      %p43 = scmp.eq.s32.totalorder %s23, 0
      %p44 = por %p42, %p43
      %p45 = scmp.ne.s32.totalorder %s31, %s32
      %p46 = scmp.eq.s32.totalorder %s24, 1
      %p47 = por %p45, %p46
      %p49 = scmp.ne.s32.totalorder %s32, %s48
      %p50 = scmp.eq.s32.totalorder %s24, 0
      %p51 = por %p49, %p50
      %s53 = sadd.s32 %s52, 1
      %p56 = scmp.eq.s32.totalorder %s18, 1
      %p57 = scmp.ne.s32.totalorder %s52, %s54
      %p58 = scmp.eq.s32.totalorder %s18, 0
      %p59 = por %p57, %p58
      %p60 = scmp.ne.s32.totalorder %s52, %s54
      %p61 = scmp.eq.s32.totalorder %s23, 1
      %p62 = por %p60, %p61
      %p63 = scmp.ne.s32.totalorder %s54, %s55
      %p64 = scmp.eq.s32.totalorder %s23, 0
      %p65 = por %p63, %p64
      %p66 = scmp.ne.s32.totalorder %s54, %s55
      %p67 = scmp.eq.s32.totalorder %s24, 1
      %p68 = por %p66, %p67
      %p70 = scmp.ne.s32.totalorder %s55, %s69
      %p71 = scmp.eq.s32.totalorder %s24, 0
      %p72 = por %p70, %p71
      %s74 = sadd.s32 %s73, 1
      %p77 = scmp.eq.s32.totalorder %s18, 1
      %p78 = scmp.ne.s32.totalorder %s73, %s75
      %p79 = scmp.eq.s32.totalorder %s18, 0
      %p80 = por %p78, %p79
      %p81 = scmp.ne.s32.totalorder %s73, %s75
      %p82 = scmp.eq.s32.totalorder %s23, 1
      %p83 = por %p81, %p82
      %p84 = scmp.ne.s32.totalorder %s75, %s76
      %p85 = scmp.eq.s32.totalorder %s23, 0
      %p86 = por %p84, %p85
      %p87 = scmp.ne.s32.totalorder %s75, %s76
      %p88 = scmp.eq.s32.totalorder %s24, 1
      %p89 = por %p87, %p88
      %p91 = scmp.ne.s32.totalorder %s76, %s90
      %p92 = scmp.eq.s32.totalorder %s24, 0
      %p93 = por %p91, %p92
      %s95 = sadd.s32 %s94, 1
      %p98 = scmp.eq.s32.totalorder %s18, 1
      %p99 = scmp.ne.s32.totalorder %s94, %s96
      %p100 = scmp.eq.s32.totalorder %s18, 0
      %p101 = por %p99, %p100
      %p102 = scmp.ne.s32.totalorder %s94, %s96
      %p103 = scmp.eq.s32.totalorder %s23, 1
      %p104 = por %p102, %p103
      %p105 = scmp.ne.s32.totalorder %s96, %s97
      %p106 = scmp.eq.s32.totalorder %s23, 0
      %p107 = por %p105, %p106
      %p108 = scmp.ne.s32.totalorder %s96, %s97
      %p109 = scmp.eq.s32.totalorder %s24, 1
      %p110 = por %p108, %p109
      %p112 = scmp.ne.s32.totalorder %s97, %s111
      %p113 = scmp.eq.s32.totalorder %s24, 0
      %p114 = por %p112, %p113
      %s116 = sadd.s32 %s115, 1
      %p119 = scmp.eq.s32.totalorder %s18, 1
      %p120 = scmp.ne.s32.totalorder %s115, %s117
      %p121 = scmp.eq.s32.totalorder %s18, 0
      %p122 = por %p120, %p121
      %p123 = scmp.ne.s32.totalorder %s115, %s117
      %p124 = scmp.eq.s32.totalorder %s23, 1
      %p125 = por %p123, %p124
      %p126 = scmp.ne.s32.totalorder %s117, %s118
      %p127 = scmp.eq.s32.totalorder %s23, 0
      %p128 = por %p126, %p127
      %p129 = scmp.ne.s32.totalorder %s117, %s118
      %p130 = scmp.eq.s32.totalorder %s24, 1
      %p131 = por %p129, %p130
      %p133 = scmp.ne.s32.totalorder %s118, %s132
      %p134 = scmp.eq.s32.totalorder %s24, 0
      %p135 = por %p133, %p134
      %s136 = ssub.s32 %s18, %s25
      %p137 = scmp.eq.s32.totalorder %s136, 0
      %s139 = sadd.s32 %s138, 1
      %s140 = scalar_select %p137, %s138, %s139
      %p143 = pneg %p137
      %p144 = scmp.eq.s32.totalorder %s18, 1
      %p145 = por %p143, %p144
      %p146 = scmp.ne.s32.totalorder %s138, %s141
      %p147 = scmp.eq.s32.totalorder %s18, 0
      %p148 = por %p146, %p147
      %p149 = scmp.ne.s32.totalorder %s138, %s141
      %p150 = scmp.eq.s32.totalorder %s23, 1
      %p151 = por %p149, %p150
      %p152 = scmp.ne.s32.totalorder %s141, %s142
      %p153 = scmp.eq.s32.totalorder %s23, 0
      %p154 = por %p152, %p153
      %p155 = scmp.ne.s32.totalorder %s141, %s142
      %p156 = scmp.eq.s32.totalorder %s24, 1
      %p157 = por %p155, %p156
      %p159 = scmp.ne.s32.totalorder %s142, %s158
      %p160 = scmp.eq.s32.totalorder %s24, 0
      %p161 = por %p159, %p160
      %p162 = scmp.le.s32.totalorder 1, %s18
      %p163 = scmp.lt.s32.totalorder %s18, 3
      %p164 = pnand %p162, %p163
      %p165 = pneg %p164
      // Predicated region
      $region9: #{tpu_custom_call.1} parent=5 // pred_check
        _
      $region10: #{tpu_custom_call.1} parent=5 // pred_check_branch
        %167 = sbr.rel (%p164) target = $region12
      $region11: #{tpu_custom_call.1} parent=5 // pred_region
        %s168 = ssub.s32 %s18, 1
        // Predicated region
        $region13: #{tpu_custom_call.1} parent=11 // pred_check
          %p169 = pneg %p65
        $region14: #{tpu_custom_call.1} parent=11 // pred_check_branch
          %171 = sbr.rel (%p169) target = $region16
        $region15: #{tpu_custom_call.1} parent=11 // pred_region
          %s173 = ssub.s32 8192, 8192
          %174 = vsyncadd [#allocation6], %s173
          %s175 = sshll.u32 [#allocation5], 4
          %s176 = int_to_ptr.vmem [resolvable:$true] %s175
          %181 = dma.hbm_to_vmem [thread:$0]  %s1, 8192, %s176, [#allocation6], 512, 512, 32
        $region16: #{tpu_custom_call.1} parent=11 // pred_fallthru
          _
        // Predicated region
        $region17: #{tpu_custom_call.1} parent=11 // pred_check
          %p182 = pneg %p86
        $region18: #{tpu_custom_call.1} parent=11 // pred_check_branch
          %184 = sbr.rel (%p182) target = $region20
        $region19: #{tpu_custom_call.1} parent=11 // pred_region
          _
        $region20: #{tpu_custom_call.1} parent=11 // pred_fallthru
          _
        // Predicated region
        $region21: #{tpu_custom_call.1} parent=11 // pred_check
          %p185 = pneg %p107
        $region22: #{tpu_custom_call.1} parent=11 // pred_check_branch
          %187 = sbr.rel (%p185) target = $region24
        $region23: #{tpu_custom_call.1} parent=11 // pred_region
          %s189 = ssub.s32 8192, 8192
          %190 = vsyncadd [#allocation6], %s189
          %s191 = sshll.u32 [#allocation7], 4
          %s192 = int_to_ptr.vmem [resolvable:$true] %s191
          %197 = dma.hbm_to_vmem [thread:$0]  %s3, 8192, %s192, [#allocation6], 128, 128, 8
        $region24: #{tpu_custom_call.1} parent=11 // pred_fallthru
          _
        // Predicated region
        $region25: #{tpu_custom_call.1} parent=11 // pred_check
          %p198 = pneg %p128
        $region26: #{tpu_custom_call.1} parent=11 // pred_check_branch
          %200 = sbr.rel (%p198) target = $region28
        $region27: #{tpu_custom_call.1} parent=11 // pred_region
          _
        $region28: #{tpu_custom_call.1} parent=11 // pred_fallthru
          _
      $region12: #{tpu_custom_call.1} parent=5 // pred_fallthru
        _
      %p201 = scmp.lt.s32.totalorder %s18, 2
      // Predicated region
      $region29: #{tpu_custom_call.1} parent=5 // pred_check
        %p202 = pneg %p201
      $region30: #{tpu_custom_call.1} parent=5 // pred_check_branch
        %204 = sbr.rel (%p202) target = $region32
      $region31: #{tpu_custom_call.1} parent=5 // pred_region
        // Predicated region
        $region33: #{tpu_custom_call.1} parent=31 // pred_check
          %p205 = pneg %p38
        $region34: #{tpu_custom_call.1} parent=31 // pred_check_branch
          %207 = sbr.rel (%p205) target = $region36
        $region35: #{tpu_custom_call.1} parent=31 // pred_region
          %s208 = sand.u32 %s28, 1
          %s209 = scalar_lea.sflag [#allocation3], %s208
          %s210 = sand.u32 %s28, 1
          %s211 = smul.addr %s210, 16
          %s212 = scalar_lea.vmem [#allocation2], %s211
          %s213 = smul.u32 2, %s18
          %s215 = ssub.s32 256, 256
          %216 = vsyncadd %s209, %s215
          %s217 = smul.addr %s213, 128
          %s218 = scalar_lea.hbm %s0, %s217
          %s219 = sshll.u32 %s212, 4
          %s220 = int_to_ptr.vmem [resolvable:$true] %s219
          %225 = dma.hbm_to_vmem [thread:$0]  %s218, 256, %s220, %s209, 128, 128, 8
        $region36: #{tpu_custom_call.1} parent=31 // pred_fallthru
          _
      $region32: #{tpu_custom_call.1} parent=5 // pred_fallthru
        _
      %p226 = scmp.le.s32.totalorder 1, %s18
      %p227 = scmp.lt.s32.totalorder %s18, 3
      %p228 = pnand %p226, %p227
      %p229 = pneg %p228
      // Predicated region
      $region37: #{tpu_custom_call.1} parent=5 // pred_check
        _
      $region38: #{tpu_custom_call.1} parent=5 // pred_check_branch
        %231 = sbr.rel (%p228) target = $region40
      $region39: #{tpu_custom_call.1} parent=5 // pred_region
        %s232 = ssub.s32 %s18, 1
        %s233 = sand.u32 %s31, 1
        %s234 = scalar_lea.sflag [#allocation3], %s233
        %s235 = sand.u32 %s31, 1
        %s236 = smul.addr %s235, 16
        %s237 = scalar_lea.vmem [#allocation2], %s236
        // Predicated region
        $region41: #{tpu_custom_call.1} parent=39 // pred_check
          %p238 = pneg %p44
        $region42: #{tpu_custom_call.1} parent=39 // pred_check_branch
          %240 = sbr.rel (%p238) target = $region44
        $region43: #{tpu_custom_call.1} parent=39 // pred_region
          %241 = dma.done %s234, 256
        $region44: #{tpu_custom_call.1} parent=39 // pred_fallthru
          _
        // Predicated region
        $region45: #{tpu_custom_call.1} parent=39 // pred_check
          %p242 = pneg %p65
        $region46: #{tpu_custom_call.1} parent=39 // pred_check_branch
          %244 = sbr.rel (%p242) target = $region48
        $region47: #{tpu_custom_call.1} parent=39 // pred_region
          %245 = dma.done [#allocation6], 8192
        $region48: #{tpu_custom_call.1} parent=39 // pred_fallthru
          _
        // Predicated region
        $region49: #{tpu_custom_call.1} parent=39 // pred_check
          %p246 = pneg %p107
        $region50: #{tpu_custom_call.1} parent=39 // pred_check_branch
          %248 = sbr.rel (%p246) target = $region52
        $region51: #{tpu_custom_call.1} parent=39 // pred_region
          %249 = dma.done [#allocation6], 8192
        $region52: #{tpu_custom_call.1} parent=39 // pred_fallthru
          _
        %s250 = sand.u32 %s31, 1
        %s251 = scalar_lea.sflag [#allocation3], %s250
        %s252 = sand.u32 %s31, 1
        %s253 = smul.addr %s252, 16
        %s254 = scalar_lea.vmem [#allocation2], %s253
        %p255 = pneg %p44
        %p256 = pneg %p41
        %p257 = pneg %p65
        %p258 = pneg %p62
        %p259 = pneg %p86
        %p260 = pneg %p83
        %p261 = pneg %p107
        %p262 = pneg %p104
        %p263 = pneg %p128
        %p264 = pneg %p125
        %p265 = pneg %p154
        %p266 = pneg %p151
        %s267 = sand.u32 %s141, 1
        %s268 = scalar_lea.sflag [#allocation4], %s267
        %s269 = sand.u32 %s141, 1
        %s270 = smul.addr %s269, 16
        %s271 = scalar_lea.vmem [#allocation8], %s270
        %s272 = smul.u32 2, %s23
        %s273 = smul.u32 2, %s23
        %v274 = vld [vmem:[%s237] sm:$0xff]
        %v275 = vld [vmem:[%s237 + $0x8] sm:$0xff]
        %v276 = vld [vmem:[#allocation5] sm:$0xff]
        %v277 = vld [vmem:[#allocation5 + $0x8] sm:$0xff]
        %v278 = vld [vmem:[#allocation5 + $0x20] sm:$0xff]
        %v279 = vld [vmem:[#allocation5 + $0x28] sm:$0xff]
        %v280 = vld [vmem:[#allocation5 + $0x40] sm:$0xff]
        %v281 = vld [vmem:[#allocation5 + $0x48] sm:$0xff]
        %v282 = vld [vmem:[#allocation5 + $0x60] sm:$0xff]
        %v283 = vld [vmem:[#allocation5 + $0x68] sm:$0xff]
        %v284 = vld [vmem:[#allocation5 + $0x80] sm:$0xff]
        %v285 = vld [vmem:[#allocation5 + $0x88] sm:$0xff]
        %v286 = vld [vmem:[#allocation5 + $0xa0] sm:$0xff]
        %v287 = vld [vmem:[#allocation5 + $0xa8] sm:$0xff]
        %v288 = vld [vmem:[#allocation5 + $0xc0] sm:$0xff]
        %v289 = vld [vmem:[#allocation5 + $0xc8] sm:$0xff]
        %v290 = vld [vmem:[#allocation5 + $0xe0] sm:$0xff]
        %v291 = vld [vmem:[#allocation5 + $0xe8] sm:$0xff]
        %v292 = vld [vmem:[#allocation5 + $0x100] sm:$0xff]
        %v293 = vld [vmem:[#allocation5 + $0x108] sm:$0xff]
        %v294 = vld [vmem:[#allocation5 + $0x120] sm:$0xff]
        %v295 = vld [vmem:[#allocation5 + $0x128] sm:$0xff]
        %v296 = vld [vmem:[#allocation5 + $0x140] sm:$0xff]
        %v297 = vld [vmem:[#allocation5 + $0x148] sm:$0xff]
        %v298 = vld [vmem:[#allocation5 + $0x160] sm:$0xff]
        %v299 = vld [vmem:[#allocation5 + $0x168] sm:$0xff]
        %v300 = vld [vmem:[#allocation5 + $0x180] sm:$0xff]
        %v301 = vld [vmem:[#allocation5 + $0x188] sm:$0xff]
        %v302 = vld [vmem:[#allocation5 + $0x1a0] sm:$0xff]
        %v303 = vld [vmem:[#allocation5 + $0x1a8] sm:$0xff]
        %v304 = vld [vmem:[#allocation5 + $0x1c0] sm:$0xff]
        %v305 = vld [vmem:[#allocation5 + $0x1c8] sm:$0xff]
        %v306 = vld [vmem:[#allocation5 + $0x1e0] sm:$0xff]
        %v307 = vld [vmem:[#allocation5 + $0x1e8] sm:$0xff]
        %v308 = vld [vmem:[%s2] sm:$0x3]
        %v309 = vld [vmem:[#allocation7] sm:$0xff]
        %v310 = vld [vmem:[#allocation7 + $0x8] sm:$0xff]
        %v311 = vld [vmem:[#allocation7 + $0x10] sm:$0xff]
        %v312 = vld [vmem:[#allocation7 + $0x18] sm:$0xff]
        %v313 = vld [vmem:[#allocation7 + $0x20] sm:$0xff]
        %v314 = vld [vmem:[#allocation7 + $0x28] sm:$0xff]
        %v315 = vld [vmem:[#allocation7 + $0x30] sm:$0xff]
        %v316 = vld [vmem:[#allocation7 + $0x38] sm:$0xff]
        %v317 = vld [vmem:[#allocation7 + $0x40] sm:$0xff]
        %v318 = vld [vmem:[#allocation7 + $0x48] sm:$0xff]
        %v319 = vld [vmem:[#allocation7 + $0x50] sm:$0xff]
        %v320 = vld [vmem:[#allocation7 + $0x58] sm:$0xff]
        %v321 = vld [vmem:[#allocation7 + $0x60] sm:$0xff]
        %v322 = vld [vmem:[#allocation7 + $0x68] sm:$0xff]
        %v323 = vld [vmem:[#allocation7 + $0x70] sm:$0xff]
        %v324 = vld [vmem:[#allocation7 + $0x78] sm:$0xff]
        %v325 = vld [vmem:[#allocation7 + $0x80] sm:$0xff]
        %v326 = vld [vmem:[#allocation7 + $0x88] sm:$0xff]
        %v327 = vld [vmem:[#allocation7 + $0x90] sm:$0xff]
        %v328 = vld [vmem:[#allocation7 + $0x98] sm:$0xff]
        %v329 = vld [vmem:[#allocation7 + $0xa0] sm:$0xff]
        %v330 = vld [vmem:[#allocation7 + $0xa8] sm:$0xff]
        %v331 = vld [vmem:[#allocation7 + $0xb0] sm:$0xff]
        %v332 = vld [vmem:[#allocation7 + $0xb8] sm:$0xff]
        %v333 = vld [vmem:[#allocation7 + $0xc0] sm:$0xff]
        %v334 = vld [vmem:[#allocation7 + $0xc8] sm:$0xff]
        %v335 = vld [vmem:[#allocation7 + $0xd0] sm:$0xff]
        %v336 = vld [vmem:[#allocation7 + $0xd8] sm:$0xff]
        %v337 = vld [vmem:[#allocation7 + $0xe0] sm:$0xff]
        %v338 = vld [vmem:[#allocation7 + $0xe8] sm:$0xff]
        %v339 = vld [vmem:[#allocation7 + $0xf0] sm:$0xff]
        %v340 = vld [vmem:[#allocation7 + $0xf8] sm:$0xff]
        %v342 = vlaneseq
        %v343 = vshrl.u32 %v342, 7
        %v344 = vsub.s32 0, %v343
        %v345 = vrot.slane %v308, %v344
        %v346 = vlaneseq
        %v347 = vshrl.u32 %v346, 7
        %v348 = vsub.s32 1, %v347
        %v349 = vrot.slane %v308, %v348
        %352 = vmatprep.subr.mxu0 %v277
        %353 = vmatpush1.msra.mxu0 %v276
        %354 = vmatprep.subr.mxu0 %v279
        %355 = vmatpush1.msra.mxu0 %v278
        %356 = vmatprep.subr.mxu0 %v281
        %357 = vmatpush1.msra.mxu0 %v280
        %358 = vmatprep.subr.mxu0 %v283
        %359 = vmatpush1.msra.mxu0 %v282
        %360 = vmatprep.subr.mxu0 %v285
        %361 = vmatpush1.msra.mxu0 %v284
        %362 = vmatprep.subr.mxu0 %v287
        %363 = vmatpush1.msra.mxu0 %v286
        %364 = vmatprep.subr.mxu0 %v289
        %365 = vmatpush1.msra.mxu0 %v288
        %366 = vmatprep.subr.mxu0 %v291
        %367 = vmatpush1.msra.mxu0 %v290
        %368 = vmatprep.subr.mxu0 %v293
        %369 = vmatpush1.msra.mxu0 %v292
        %370 = vmatprep.subr.mxu0 %v295
        %371 = vmatpush1.msra.mxu0 %v294
        %372 = vmatprep.subr.mxu0 %v297
        %373 = vmatpush1.msra.mxu0 %v296
        %374 = vmatprep.subr.mxu0 %v299
        %375 = vmatpush1.msra.mxu0 %v298
        %376 = vmatprep.subr.mxu0 %v301
        %377 = vmatpush1.msra.mxu0 %v300
        %378 = vmatprep.subr.mxu0 %v303
        %379 = vmatpush1.msra.mxu0 %v302
        %380 = vmatprep.subr.mxu0 %v305
        %381 = vmatpush1.msra.mxu0 %v304
        %382 = vmatprep.subr.mxu0 %v307
        %383 = vmatpush1.msra.mxu0 %v306
        %384 = vmatprep.subr.mxu0 0.0
        %385 = vmatpush1.msra.mxu0 0.0
        %386 = vmatprep.subr.mxu0 0.0
        %387 = vmatpush1.msra.mxu0 0.0
        %388 = vmatprep.subr.mxu0 0.0
        %389 = vmatpush1.msra.mxu0 0.0
        %390 = vmatprep.subr.mxu0 0.0
        %391 = vmatpush1.msra.mxu0 0.0
        %392 = vmatprep.subr.mxu0 0.0
        %393 = vmatpush1.msra.mxu0 0.0
        %394 = vmatprep.subr.mxu0 0.0
        %395 = vmatpush1.msra.mxu0 0.0
        %396 = vmatprep.subr.mxu0 0.0
        %397 = vmatpush1.msra.mxu0 0.0
        %398 = vmatprep.subr.mxu0 0.0
        %399 = vmatpush1.msra.mxu0 0.0
        %400 = vmatprep.subr.mxu0 0.0
        %401 = vmatpush1.msra.mxu0 0.0
        %402 = vmatprep.subr.mxu0 0.0
        %403 = vmatpush1.msra.mxu0 0.0
        %404 = vmatprep.subr.mxu0 0.0
        %405 = vmatpush1.msra.mxu0 0.0
        %406 = vmatprep.subr.mxu0 0.0
        %407 = vmatpush1.msra.mxu0 0.0
        %408 = vmatprep.subr.mxu0 0.0
        %409 = vmatpush1.msra.mxu0 0.0
        %410 = vmatprep.subr.mxu0 0.0
        %411 = vmatpush1.msra.mxu0 0.0
        %412 = vmatprep.subr.mxu0 0.0
        %413 = vmatpush1.msra.mxu0 0.0
        %414 = vmatprep.subr.mxu0 0.0
        %415 = vmatpush1.msra.mxu0 0.0
        %416 = vmatprep.mubr.f32.mxu0 0.0
        %417 = vmatmul.mubr.f32.gmra.mrb[0].mxu0 %v274
        %v418 = vpop.f32.mrb[0].mxu0
        %v419 = vadd.f32 %v345, %v418
        %v420 = vpop.f32.mrb[0].mxu0
        %v421 = vadd.f32 %v349, %v420
        %422 = vmatprep.mubr.f32.mxu0 0.0
        %423 = vmatmul.mubr.f32.gmra.mrb[0].mxu0 %v275
        %v424 = vpop.f32.mrb[0].mxu0
        %v425 = vadd.f32 %v345, %v424
        %v426 = vpop.f32.mrb[0].mxu0
        %v427 = vadd.f32 %v349, %v426
        %428 = vdwg.mxu0
        %v429 = vmul.f32 %v419, 0.5
        %v430 = vmul.f32 %v421, 0.5
        %v431 = vmul.f32 %v425, 0.5
        %v432 = vmul.f32 %v427, 0.5
        %v433 = vmul.f32 %v419, 0.70710677
        %v434 = vmul.f32 %v421, 0.70710677
        %v435 = vmul.f32 %v425, 0.70710677
        %v436 = vmul.f32 %v427, 0.70710677
        %v437 = verf.f32.pop %v433
        %v438 = verf.f32.pop %v434
        %v439 = verf.f32.pop %v435
        %v440 = verf.f32.pop %v436
        %v441 = vadd.f32 %v437, 1.0
        %v442 = vadd.f32 %v438, 1.0
        %v443 = vadd.f32 %v439, 1.0
        %v444 = vadd.f32 %v440, 1.0
        %v445 = vmul.f32 %v429, %v441
        %v446 = vmul.f32 %v430, %v442
        %v447 = vmul.f32 %v431, %v443
        %v448 = vmul.f32 %v432, %v444
        %s449 = scalar_lea.vmem [#allocation5], 16
        %v450 = vld [vmem:[%s449] sm:$0xff]
        %v451 = vld [vmem:[%s449 + $0x8] sm:$0xff]
        %v452 = vld [vmem:[%s449 + $0x20] sm:$0xff]
        %v453 = vld [vmem:[%s449 + $0x28] sm:$0xff]
        %v454 = vld [vmem:[%s449 + $0x40] sm:$0xff]
        %v455 = vld [vmem:[%s449 + $0x48] sm:$0xff]
        %v456 = vld [vmem:[%s449 + $0x60] sm:$0xff]
        %v457 = vld [vmem:[%s449 + $0x68] sm:$0xff]
        %v458 = vld [vmem:[%s449 + $0x80] sm:$0xff]
        %v459 = vld [vmem:[%s449 + $0x88] sm:$0xff]
        %v460 = vld [vmem:[%s449 + $0xa0] sm:$0xff]
        %v461 = vld [vmem:[%s449 + $0xa8] sm:$0xff]
        %v462 = vld [vmem:[%s449 + $0xc0] sm:$0xff]
        %v463 = vld [vmem:[%s449 + $0xc8] sm:$0xff]
        %v464 = vld [vmem:[%s449 + $0xe0] sm:$0xff]
        %v465 = vld [vmem:[%s449 + $0xe8] sm:$0xff]
        %v466 = vld [vmem:[%s449 + $0x100] sm:$0xff]
        %v467 = vld [vmem:[%s449 + $0x108] sm:$0xff]
        %v468 = vld [vmem:[%s449 + $0x120] sm:$0xff]
        %v469 = vld [vmem:[%s449 + $0x128] sm:$0xff]
        %v470 = vld [vmem:[%s449 + $0x140] sm:$0xff]
        %v471 = vld [vmem:[%s449 + $0x148] sm:$0xff]
        %v472 = vld [vmem:[%s449 + $0x160] sm:$0xff]
        %v473 = vld [vmem:[%s449 + $0x168] sm:$0xff]
        %v474 = vld [vmem:[%s449 + $0x180] sm:$0xff]
        %v475 = vld [vmem:[%s449 + $0x188] sm:$0xff]
        %v476 = vld [vmem:[%s449 + $0x1a0] sm:$0xff]
        %v477 = vld [vmem:[%s449 + $0x1a8] sm:$0xff]
        %v478 = vld [vmem:[%s449 + $0x1c0] sm:$0xff]
        %v479 = vld [vmem:[%s449 + $0x1c8] sm:$0xff]
        %v480 = vld [vmem:[%s449 + $0x1e0] sm:$0xff]
        %v481 = vld [vmem:[%s449 + $0x1e8] sm:$0xff]
        %s482 = scalar_lea.vmem %s2, 2
        %v483 = vld [vmem:[%s482] sm:$0x3]
        %s484 = scalar_lea.vmem [#allocation7], 256
        %v485 = vld [vmem:[%s484] sm:$0xff]
        %v486 = vld [vmem:[%s484 + $0x8] sm:$0xff]
        %v487 = vld [vmem:[%s484 + $0x10] sm:$0xff]
        %v488 = vld [vmem:[%s484 + $0x18] sm:$0xff]
        %v489 = vld [vmem:[%s484 + $0x20] sm:$0xff]
        %v490 = vld [vmem:[%s484 + $0x28] sm:$0xff]
        %v491 = vld [vmem:[%s484 + $0x30] sm:$0xff]
        %v492 = vld [vmem:[%s484 + $0x38] sm:$0xff]
        %v493 = vld [vmem:[%s484 + $0x40] sm:$0xff]
        %v494 = vld [vmem:[%s484 + $0x48] sm:$0xff]
        %v495 = vld [vmem:[%s484 + $0x50] sm:$0xff]
        %v496 = vld [vmem:[%s484 + $0x58] sm:$0xff]
        %v497 = vld [vmem:[%s484 + $0x60] sm:$0xff]
        %v498 = vld [vmem:[%s484 + $0x68] sm:$0xff]
        %v499 = vld [vmem:[%s484 + $0x70] sm:$0xff]
        %v500 = vld [vmem:[%s484 + $0x78] sm:$0xff]
        %v501 = vld [vmem:[%s484 + $0x80] sm:$0xff]
        %v502 = vld [vmem:[%s484 + $0x88] sm:$0xff]
        %v503 = vld [vmem:[%s484 + $0x90] sm:$0xff]
        %v504 = vld [vmem:[%s484 + $0x98] sm:$0xff]
        %v505 = vld [vmem:[%s484 + $0xa0] sm:$0xff]
        %v506 = vld [vmem:[%s484 + $0xa8] sm:$0xff]
        %v507 = vld [vmem:[%s484 + $0xb0] sm:$0xff]
        %v508 = vld [vmem:[%s484 + $0xb8] sm:$0xff]
        %v509 = vld [vmem:[%s484 + $0xc0] sm:$0xff]
        %v510 = vld [vmem:[%s484 + $0xc8] sm:$0xff]
        %v511 = vld [vmem:[%s484 + $0xd0] sm:$0xff]
        %v512 = vld [vmem:[%s484 + $0xd8] sm:$0xff]
        %v513 = vld [vmem:[%s484 + $0xe0] sm:$0xff]
        %v514 = vld [vmem:[%s484 + $0xe8] sm:$0xff]
        %v515 = vld [vmem:[%s484 + $0xf0] sm:$0xff]
        %v516 = vld [vmem:[%s484 + $0xf8] sm:$0xff]
        %v518 = vlaneseq
        %v519 = vshrl.u32 %v518, 7
        %v520 = vsub.s32 0, %v519
        %v521 = vrot.slane %v483, %v520
        %v522 = vlaneseq
        %v523 = vshrl.u32 %v522, 7
        %v524 = vsub.s32 1, %v523
        %v525 = vrot.slane %v483, %v524
        %528 = vmatprep.subr.mxu0 %v451
        %529 = vmatpush1.msra.mxu0 %v450
        %530 = vmatprep.subr.mxu0 %v453
        %531 = vmatpush1.msra.mxu0 %v452
        %532 = vmatprep.subr.mxu0 %v455
        %533 = vmatpush1.msra.mxu0 %v454
        %534 = vmatprep.subr.mxu0 %v457
        %535 = vmatpush1.msra.mxu0 %v456
        %536 = vmatprep.subr.mxu0 %v459
        %537 = vmatpush1.msra.mxu0 %v458
        %538 = vmatprep.subr.mxu0 %v461
        %539 = vmatpush1.msra.mxu0 %v460
        %540 = vmatprep.subr.mxu0 %v463
        %541 = vmatpush1.msra.mxu0 %v462
        %542 = vmatprep.subr.mxu0 %v465
        %543 = vmatpush1.msra.mxu0 %v464
        %544 = vmatprep.subr.mxu0 %v467
        %545 = vmatpush1.msra.mxu0 %v466
        %546 = vmatprep.subr.mxu0 %v469
        %547 = vmatpush1.msra.mxu0 %v468
        %548 = vmatprep.subr.mxu0 %v471
        %549 = vmatpush1.msra.mxu0 %v470
        %550 = vmatprep.subr.mxu0 %v473
        %551 = vmatpush1.msra.mxu0 %v472
        %552 = vmatprep.subr.mxu0 %v475
        %553 = vmatpush1.msra.mxu0 %v474
        %554 = vmatprep.subr.mxu0 %v477
        %555 = vmatpush1.msra.mxu0 %v476
        %556 = vmatprep.subr.mxu0 %v479
        %557 = vmatpush1.msra.mxu0 %v478
        %558 = vmatprep.subr.mxu0 %v481
        %559 = vmatpush1.msra.mxu0 %v480
        %560 = vmatprep.subr.mxu0 0.0
        %561 = vmatpush1.msra.mxu0 0.0
        %562 = vmatprep.subr.mxu0 0.0
        %563 = vmatpush1.msra.mxu0 0.0
        %564 = vmatprep.subr.mxu0 0.0
        %565 = vmatpush1.msra.mxu0 0.0
        %566 = vmatprep.subr.mxu0 0.0
        %567 = vmatpush1.msra.mxu0 0.0
        %568 = vmatprep.subr.mxu0 0.0
        %569 = vmatpush1.msra.mxu0 0.0
        %570 = vmatprep.subr.mxu0 0.0
        %571 = vmatpush1.msra.mxu0 0.0
        %572 = vmatprep.subr.mxu0 0.0
        %573 = vmatpush1.msra.mxu0 0.0
        %574 = vmatprep.subr.mxu0 0.0
        %575 = vmatpush1.msra.mxu0 0.0
        %576 = vmatprep.subr.mxu0 0.0
        %577 = vmatpush1.msra.mxu0 0.0
        %578 = vmatprep.subr.mxu0 0.0
        %579 = vmatpush1.msra.mxu0 0.0
        %580 = vmatprep.subr.mxu0 0.0
        %581 = vmatpush1.msra.mxu0 0.0
        %582 = vmatprep.subr.mxu0 0.0
        %583 = vmatpush1.msra.mxu0 0.0
        %584 = vmatprep.subr.mxu0 0.0
        %585 = vmatpush1.msra.mxu0 0.0
        %586 = vmatprep.subr.mxu0 0.0
        %587 = vmatpush1.msra.mxu0 0.0
        %588 = vmatprep.subr.mxu0 0.0
        %589 = vmatpush1.msra.mxu0 0.0
        %590 = vmatprep.subr.mxu0 0.0
        %591 = vmatpush1.msra.mxu0 0.0
        %592 = vmatprep.mubr.f32.mxu0 0.0
        %593 = vmatmul.mubr.f32.gmra.mrb[0].mxu0 %v274
        %v594 = vpop.f32.mrb[0].mxu0
        %v595 = vadd.f32 %v521, %v594
        %v596 = vpop.f32.mrb[0].mxu0
        %v597 = vadd.f32 %v525, %v596
        %598 = vmatprep.mubr.f32.mxu0 0.0
        %599 = vmatmul.mubr.f32.gmra.mrb[0].mxu0 %v275
        %v600 = vpop.f32.mrb[0].mxu0
        %v601 = vadd.f32 %v521, %v600
        %v602 = vpop.f32.mrb[0].mxu0
        %v603 = vadd.f32 %v525, %v602
        %604 = vdwg.mxu0
        %v605 = vmul.f32 %v595, 0.5
        %v606 = vmul.f32 %v597, 0.5
        %v607 = vmul.f32 %v601, 0.5
        %v608 = vmul.f32 %v603, 0.5
        %v609 = vmul.f32 %v595, 0.70710677
        %v610 = vmul.f32 %v597, 0.70710677
        %v611 = vmul.f32 %v601, 0.70710677
        %v612 = vmul.f32 %v603, 0.70710677
        %v613 = verf.f32.pop %v609
        %v614 = verf.f32.pop %v610
        %v615 = verf.f32.pop %v611
        %v616 = verf.f32.pop %v612
        %v617 = vadd.f32 %v613, 1.0
        %v618 = vadd.f32 %v614, 1.0
        %v619 = vadd.f32 %v615, 1.0
        %v620 = vadd.f32 %v616, 1.0
        %v621 = vmul.f32 %v605, %v617
        %v622 = vmul.f32 %v606, %v618
        %v623 = vmul.f32 %v607, %v619
        %v624 = vmul.f32 %v608, %v620
        %625 = vmatprep.subr.mxu0 0.0
        %626 = vmatpush1.msra.mxu0 %v485
        %627 = vmatprep.subr.mxu0 0.0
        %628 = vmatpush1.msra.mxu0 %v486
        %629 = vmatprep.subr.mxu0 0.0
        %630 = vmatpush1.msra.mxu0 %v487
        %631 = vmatprep.subr.mxu0 0.0
        %632 = vmatpush1.msra.mxu0 %v488
        %633 = vmatprep.subr.mxu0 0.0
        %634 = vmatpush1.msra.mxu0 %v489
        %635 = vmatprep.subr.mxu0 0.0
        %636 = vmatpush1.msra.mxu0 %v490
        %637 = vmatprep.subr.mxu0 0.0
        %638 = vmatpush1.msra.mxu0 %v491
        %639 = vmatprep.subr.mxu0 0.0
        %640 = vmatpush1.msra.mxu0 %v492
        %641 = vmatprep.subr.mxu0 0.0
        %642 = vmatpush1.msra.mxu0 %v493
        %643 = vmatprep.subr.mxu0 0.0
        %644 = vmatpush1.msra.mxu0 %v494
        %645 = vmatprep.subr.mxu0 0.0
        %646 = vmatpush1.msra.mxu0 %v495
        %647 = vmatprep.subr.mxu0 0.0
        %648 = vmatpush1.msra.mxu0 %v496
        %649 = vmatprep.subr.mxu0 0.0
        %650 = vmatpush1.msra.mxu0 %v497
        %651 = vmatprep.subr.mxu0 0.0
        %652 = vmatpush1.msra.mxu0 %v498
        %653 = vmatprep.subr.mxu0 0.0
        %654 = vmatpush1.msra.mxu0 %v499
        %655 = vmatprep.subr.mxu0 0.0
        %656 = vmatpush1.msra.mxu0 %v500
        %657 = vmatprep.subr.mxu0 0.0
        %658 = vmatpush1.msra.mxu0 %v501
        %659 = vmatprep.subr.mxu0 0.0
        %660 = vmatpush1.msra.mxu0 %v502
        %661 = vmatprep.subr.mxu0 0.0
        %662 = vmatpush1.msra.mxu0 %v503
        %663 = vmatprep.subr.mxu0 0.0
        %664 = vmatpush1.msra.mxu0 %v504
        %665 = vmatprep.subr.mxu0 0.0
        %666 = vmatpush1.msra.mxu0 %v505
        %667 = vmatprep.subr.mxu0 0.0
        %668 = vmatpush1.msra.mxu0 %v506
        %669 = vmatprep.subr.mxu0 0.0
        %670 = vmatpush1.msra.mxu0 %v507
        %671 = vmatprep.subr.mxu0 0.0
        %672 = vmatpush1.msra.mxu0 %v508
        %673 = vmatprep.subr.mxu0 0.0
        %674 = vmatpush1.msra.mxu0 %v509
        %675 = vmatprep.subr.mxu0 0.0
        %676 = vmatpush1.msra.mxu0 %v510
        %677 = vmatprep.subr.mxu0 0.0
        %678 = vmatpush1.msra.mxu0 %v511
        %679 = vmatprep.subr.mxu0 0.0
        %680 = vmatpush1.msra.mxu0 %v512
        %681 = vmatprep.subr.mxu0 0.0
        %682 = vmatpush1.msra.mxu0 %v513
        %683 = vmatprep.subr.mxu0 0.0
        %684 = vmatpush1.msra.mxu0 %v514
        %685 = vmatprep.subr.mxu0 0.0
        %686 = vmatpush1.msra.mxu0 %v515
        %687 = vmatprep.subr.mxu0 0.0
        %688 = vmatpush1.msra.mxu0 %v516
        %689 = vmatprep.mubr.f32.mxu0 %v622
        %690 = vmatmul.mubr.f32.gmra.mrb[0].mxu0 %v621
        %v691 = vpop.f32.mrb[0].mxu0
        %v692 = vadd.f32 0.0, %v691
        %v693 = vpop.f32.mrb[0].mxu0
        %694 = vmatprep.mubr.f32.mxu0 %v624
        %695 = vmatmul.mubr.f32.gmra.mrb[0].mxu0 %v623
        %v696 = vpop.f32.mrb[0].mxu0
        %v697 = vadd.f32 0.0, %v696
        %v698 = vpop.f32.mrb[0].mxu0
        %699 = vdwg.mxu0
        %700 = vmatprep.subr.mxu0 0.0
        %701 = vmatpush1.msra.mxu0 %v309
        %702 = vmatprep.subr.mxu0 0.0
        %703 = vmatpush1.msra.mxu0 %v310
        %704 = vmatprep.subr.mxu0 0.0
        %705 = vmatpush1.msra.mxu0 %v311
        %706 = vmatprep.subr.mxu0 0.0
        %707 = vmatpush1.msra.mxu0 %v312
        %708 = vmatprep.subr.mxu0 0.0
        %709 = vmatpush1.msra.mxu0 %v313
        %710 = vmatprep.subr.mxu0 0.0
        %711 = vmatpush1.msra.mxu0 %v314
        %712 = vmatprep.subr.mxu0 0.0
        %713 = vmatpush1.msra.mxu0 %v315
        %714 = vmatprep.subr.mxu0 0.0
        %715 = vmatpush1.msra.mxu0 %v316
        %716 = vmatprep.subr.mxu0 0.0
        %717 = vmatpush1.msra.mxu0 %v317
        %718 = vmatprep.subr.mxu0 0.0
        %719 = vmatpush1.msra.mxu0 %v318
        %720 = vmatprep.subr.mxu0 0.0
        %721 = vmatpush1.msra.mxu0 %v319
        %722 = vmatprep.subr.mxu0 0.0
        %723 = vmatpush1.msra.mxu0 %v320
        %724 = vmatprep.subr.mxu0 0.0
        %725 = vmatpush1.msra.mxu0 %v321
        %726 = vmatprep.subr.mxu0 0.0
        %727 = vmatpush1.msra.mxu0 %v322
        %728 = vmatprep.subr.mxu0 0.0
        %729 = vmatpush1.msra.mxu0 %v323
        %730 = vmatprep.subr.mxu0 0.0
        %731 = vmatpush1.msra.mxu0 %v324
        %732 = vmatprep.subr.mxu0 0.0
        %733 = vmatpush1.msra.mxu0 %v325
        %734 = vmatprep.subr.mxu0 0.0
        %735 = vmatpush1.msra.mxu0 %v326
        %736 = vmatprep.subr.mxu0 0.0
        %737 = vmatpush1.msra.mxu0 %v327
        %738 = vmatprep.subr.mxu0 0.0
        %739 = vmatpush1.msra.mxu0 %v328
        %740 = vmatprep.subr.mxu0 0.0
        %741 = vmatpush1.msra.mxu0 %v329
        %742 = vmatprep.subr.mxu0 0.0
        %743 = vmatpush1.msra.mxu0 %v330
        %744 = vmatprep.subr.mxu0 0.0
        %745 = vmatpush1.msra.mxu0 %v331
        %746 = vmatprep.subr.mxu0 0.0
        %747 = vmatpush1.msra.mxu0 %v332
        %748 = vmatprep.subr.mxu0 0.0
        %749 = vmatpush1.msra.mxu0 %v333
        %750 = vmatprep.subr.mxu0 0.0
        %751 = vmatpush1.msra.mxu0 %v334
        %752 = vmatprep.subr.mxu0 0.0
        %753 = vmatpush1.msra.mxu0 %v335
        %754 = vmatprep.subr.mxu0 0.0
        %755 = vmatpush1.msra.mxu0 %v336
        %756 = vmatprep.subr.mxu0 0.0
        %757 = vmatpush1.msra.mxu0 %v337
        %758 = vmatprep.subr.mxu0 0.0
        %759 = vmatpush1.msra.mxu0 %v338
        %760 = vmatprep.subr.mxu0 0.0
        %761 = vmatpush1.msra.mxu0 %v339
        %762 = vmatprep.subr.mxu0 0.0
        %763 = vmatpush1.msra.mxu0 %v340
        %764 = vmatprep.mubr.f32.mxu0 %v446
        %765 = vmatmul.mubr.f32.gmra.mrb[0].mxu0 %v445
        %v766 = vpop.f32.mrb[0].mxu0
        %v767 = vadd.f32 %v692, %v766
        %v768 = vpop.f32.mrb[0].mxu0
        %769 = vmatprep.mubr.f32.mxu0 %v448
        %770 = vmatmul.mubr.f32.gmra.mrb[0].mxu0 %v447
        %v771 = vpop.f32.mrb[0].mxu0
        %v772 = vadd.f32 %v697, %v771
        %v773 = vpop.f32.mrb[0].mxu0
        %774 = vdwg.mxu0
        %v775 = vld [vmem:[%s4] sm:$0x1]
        %v777 = vlaneseq
        %v778 = vshrl.u32 %v777, 7
        %v779 = vsub.s32 0, %v778
        %v780 = vrot.slane %v775, %v779
        %v782 = vadd.f32 %v767, %v780
        %v783 = vadd.f32 %v772, %v780
        %784 = vst [vmem:[%s271] sm:$0xff] %v782
        %785 = vst [vmem:[%s271 + $0x8] sm:$0xff] %v783
        %s786 = sand.u32 %s141, 1
        %s787 = scalar_lea.sflag [#allocation4], %s786
        %s788 = sand.u32 %s141, 1
        %s789 = smul.addr %s788, 16
        %s790 = scalar_lea.vmem [#allocation8], %s789
        // Predicated region
        $region53: #{tpu_custom_call.1} parent=39 // pred_check
          %p791 = pneg %p151
        $region54: #{tpu_custom_call.1} parent=39 // pred_check_branch
          %793 = sbr.rel (%p791) target = $region56
        $region55: #{tpu_custom_call.1} parent=39 // pred_region
          %s794 = smul.u32 2, %s23
          %s796 = ssub.s32 256, 256
          %797 = vsyncadd %s787, %s796
          %s798 = smul.addr %s794, 128
          %s799 = scalar_lea.hbm %s5, %s798
          %s800 = sshll.u32 %s790, 4
          %s801 = int_to_ptr.vmem [resolvable:$true] %s800
          %806 = dma.vmem_to_hbm [thread:$0]  %s801, 256, %s799, %s787, 128, 128, 8
        $region56: #{tpu_custom_call.1} parent=39 // pred_fallthru
          _
      $region40: #{tpu_custom_call.1} parent=5 // pred_fallthru
        _
      %p807 = scmp.le.s32.totalorder 2, %s18
      // Predicated region
      $region57: #{tpu_custom_call.1} parent=5 // pred_check
        %p808 = pneg %p807
      $region58: #{tpu_custom_call.1} parent=5 // pred_check_branch
        %810 = sbr.rel (%p808) target = $region60
      $region59: #{tpu_custom_call.1} parent=5 // pred_region
        %s811 = ssub.s32 %s18, 2
        // Predicated region
        $region61: #{tpu_custom_call.1} parent=59 // pred_check
          %p812 = pneg %p157
        $region62: #{tpu_custom_call.1} parent=59 // pred_check_branch
          %814 = sbr.rel (%p812) target = $region64
        $region63: #{tpu_custom_call.1} parent=59 // pred_region
          %s815 = sand.u32 %s142, 1
          %s816 = scalar_lea.sflag [#allocation4], %s815
          %s817 = sand.u32 %s142, 1
          %s818 = smul.addr %s817, 16
          %s819 = scalar_lea.vmem [#allocation8], %s818
          %820 = dma.done %s816, 256
        $region64: #{tpu_custom_call.1} parent=59 // pred_fallthru
          _
      $region60: #{tpu_custom_call.1} parent=5 // pred_fallthru
        _
    $region6: #{tpu_custom_call.1} parent=1 // loop_footer
      %s22 = sadd.s32 1, %s18
    $region7: #{tpu_custom_call.1} parent=1 // loop_footer_branch
      %17 = sbr.rel target = $region3
    $region8: #{tpu_custom_call.1} parent=1 // loop_exit
      _
    %821 = vsyncpa [#allocation3], 1
    %s822 = scalar_lea.sflag [#allocation3], 1
    %823 = vsyncpa %s822, 1
    %824 = vsyncpa [#allocation6], 1
    %825 = vsyncpa [#allocation4], 1
    %s826 = scalar_lea.sflag [#allocation4], 1
    %827 = vsyncpa %s826, 1

</llo_original>
